<compile_context>
chip_gen: v6e
topology: v6e:2x2x1
jax: 0.10.0
libtpu: 0.0.40
codegen_flags: <defaults>
</compile_context>

<pallas_src>
import jax
import jax.numpy as jnp
from jax.experimental import pallas as pl
from jax.experimental.pallas import tpu as pltpu


def _focus_conv_kernel(x_ref, w_ref, b_ref, o_ref):
    # x_ref: (1, K, tn)   bf16  space-to-depth pixels, channel-major
    # w_ref: (c2, K)      bf16  BN-scale-folded 1x1 conv weight (grid-resident)
    # b_ref: (c2, 1)      f32   fused BN bias (grid-resident)
    # o_ref: (1, c2, tn)  bf16  NCHW output tile (pixels on the lane axis)
    y = jnp.dot(w_ref[...], x_ref[0], preferred_element_type=jnp.float32)
    y = y + b_ref[...]                                  # (c2, tn), f32 epilogue
    # SiLU: y*sigmoid(y) == 0.5*y*(tanh(0.5*y)+1).  Single EUP push (tanh) per
    # f32 vreg instead of exp + reciprocal; saturates correctly for large |y|.
    o_ref[0] = (0.5 * y * (jnp.tanh(0.5 * y) + 1.0)).astype(o_ref.dtype)


def _choose_pixel_tile(n_pix, batch, k, c2, target=8192):
    """Pick the pixel-tile width.

    Preference order: no ragged tail (tile divides n_pix), lane-dense stores
    (multiple of 128 or full extent), >= 2 total grid steps (v7x megacore),
    and a double-buffered VMEM footprint far below every generation's default
    scoped VMEM limit.
    """
    # bf16 in-block + bf16 out-block, double buffered -> ~4*(K + c2) B / pixel.
    bytes_per_px = 4 * (k + c2)
    target = max(128, min(target, (12 << 20) // max(bytes_per_px, 1)))

    cap = min(target, n_pix)
    if batch == 1:
        # keep at least 2 grid steps so both v7x TensorCores get work
        cap = min(cap, max(128, n_pix // 2))

    if n_pix <= cap:                         # whole pixel extent in one tile
        return n_pix
    if n_pix % 128 == 0:                     # largest 128-aligned divisor <= cap
        g = n_pix // 128
        for d in range(min(g, cap // 128), 0, -1):
            if g % d == 0:
                return 128 * d
    if cap >= 128:                           # fallback: ragged tail gets padded
        return cap - cap % 128
    return n_pix


def focus_forward(x_nchw, conv_weight, bn_gamma, bn_beta, bn_mean, bn_var,
                  *, eps=1e-5, pixel_tile=8192):
    """Focus (space-to-depth) + 1x1 Conv(no bias) + BatchNorm(eval) + SiLU.

    x_nchw: (B, c1, H, W) f32; conv_weight: (c2, 4*c1, 1, 1).
    Returns (B, c2, H//2, W//2) bf16.
    """
    B, c1, H, W = x_nchw.shape
    c2 = conv_weight.shape[0]
    H2, W2 = H // 2, W // 2
    K = 4 * c1
    n_pix = H2 * W2

    # ---- Focus space-to-depth (XLA fuses slice+concat+cast into a single
    #      pass producing the bf16 channel-major slab the kernel reads;
    #      no NHWC transpose is ever materialized). --------------------------
    p00 = x_nchw[:, :, 0::2, 0::2]     # even rows, even cols
    p10 = x_nchw[:, :, 1::2, 0::2]     # odd rows,  even cols
    p01 = x_nchw[:, :, 0::2, 1::2]     # even rows, odd cols
    p11 = x_nchw[:, :, 1::2, 1::2]     # odd rows,  odd cols
    xf = jnp.concatenate([p00, p10, p01, p11], axis=1)        # (B, K, H2, W2)
    xf = xf.reshape(B, K, n_pix).astype(jnp.bfloat16)         # channel-major

    # ---- fold BN scale into the 1x1 conv weight; keep only bias for epilogue.
    scale = bn_gamma / jnp.sqrt(bn_var + eps)                         # (c2,)
    w = (conv_weight[:, :, 0, 0] * scale[:, None]).astype(jnp.bfloat16)  # (c2,K)
    bias = (bn_beta - bn_mean * scale).reshape(c2, 1).astype(jnp.float32)

    # ---- pixel tiling ------------------------------------------------------
    tn = _choose_pixel_tile(n_pix, B, K, c2, target=pixel_tile)
    n_tiles = -(-n_pix // tn)              # cdiv
    n_pad = n_tiles * tn
    if n_pad != n_pix:                     # only on the fallback (non-divisor) path
        xf = jnp.pad(xf, ((0, 0), (0, 0), (0, n_pad - n_pix)))

    flops = 2 * B * c2 * K * n_pad
    bytes_accessed = (xf.size * 2 + w.size * 2 + bias.size * 4
                      + B * c2 * n_pad * 2)

    out_flat = pl.pallas_call(
        _focus_conv_kernel,
        out_shape=jax.ShapeDtypeStruct((B, c2, n_pad), jnp.bfloat16),
        grid_spec=pltpu.PrefetchScalarGridSpec(
            num_scalar_prefetch=0,
            grid=(B, n_tiles),
            in_specs=[
                pl.BlockSpec((1, K, tn), lambda b, j: (b, 0, j)),
                pl.BlockSpec((c2, K), lambda b, j: (0, 0)),
                pl.BlockSpec((c2, 1), lambda b, j: (0, 0)),
            ],
            out_specs=pl.BlockSpec((1, c2, tn), lambda b, j: (b, 0, j)),
        ),
        compiler_params=pltpu.CompilerParams(
            dimension_semantics=("parallel", "parallel")),
        cost_estimate=pl.CostEstimate(
            flops=flops,
            transcendentals=B * c2 * n_pad,
            bytes_accessed=bytes_accessed),
    )(xf, w, bias)

    if n_pad != n_pix:                     # drop ragged-tail padding if any
        out_flat = out_flat[:, :, :n_pix]
    # reshape is copy-free: output is already NCHW with pixels flattened.
    return out_flat.reshape(B, c2, H2, W2)


def _reference(x_nchw, conv_weight, bn_gamma, bn_beta, bn_mean, bn_var, eps=1e-5):
    """Pure-JAX f32 reference: Focus cat -> conv1x1 -> BN(eval) -> SiLU."""
    p00 = x_nchw[:, :, 0::2, 0::2]
    p10 = x_nchw[:, :, 1::2, 0::2]
    p01 = x_nchw[:, :, 0::2, 1::2]
    p11 = x_nchw[:, :, 1::2, 1::2]
    xf = jnp.concatenate([p00, p10, p01, p11], axis=1)
    y = jax.lax.conv_general_dilated(
        xf, conv_weight, window_strides=(1, 1), padding="VALID",
        dimension_numbers=("NCHW", "OIHW", "NCHW"))
    scale = bn_gamma / jnp.sqrt(bn_var + eps)
    bias = bn_beta - bn_mean * scale
    y = y * scale[None, :, None, None] + bias[None, :, None, None]
    return y * jax.nn.sigmoid(y)


if __name__ == "__main__":
    key = jax.random.PRNGKey(0)
    B, c1, H, W = 2, 4, 16, 16
    c2 = 8

    k_x, k_w, k_g, k_b, k_m, k_v = jax.random.split(key, 6)
    x = jax.random.normal(k_x, (B, c1, H, W), dtype=jnp.float32)
    # Conv2d(c1*4, c2, k=1, bias=False) -> weight (c2, 4*c1, 1, 1)
    conv_w = 0.1 * jax.random.normal(k_w, (c2, 4 * c1, 1, 1), dtype=jnp.float32)
    # BatchNorm2d(c2) params / running stats (deterministic, non-trivial)
    bn_gamma = 1.0 + 0.1 * jax.random.normal(k_g, (c2,), dtype=jnp.float32)
    bn_beta = 0.1 * jax.random.normal(k_b, (c2,), dtype=jnp.float32)
    bn_mean = 0.05 * jax.random.normal(k_m, (c2,), dtype=jnp.float32)
    bn_var = jnp.abs(1.0 + 0.1 * jax.random.normal(k_v, (c2,), dtype=jnp.float32))

    fwd = jax.jit(focus_forward)
    out = jax.block_until_ready(
        fwd(x, conv_w, bn_gamma, bn_beta, bn_mean, bn_var))

    ref = _reference(x, conv_w, bn_gamma, bn_beta, bn_mean, bn_var)
    assert out.shape == (B, c2, H // 2, W // 2)
    assert out.dtype == jnp.bfloat16
    # bf16 activations/weight on the MXU (f32 accumulation) and bf16 output
    # -> loosened tolerance vs the pure-f32 reference.
    err = jnp.max(jnp.abs(out.astype(jnp.float32) - ref))
    assert jnp.allclose(out.astype(jnp.float32), ref, atol=3e-2, rtol=3e-2), float(err)
    print("KERNEL_OK")
</pallas_src>

<mosaic_0001>
module attributes {stable_mosaic.version = 11 : i64} {
  func.func @_focus_conv_kernel(%arg0: i32, %arg1: i32, %arg2: memref<1x16x64xbf16, #tpu.memory_space<vmem>>, %arg3: memref<8x16xbf16, #tpu.memory_space<vmem>>, %arg4: memref<8x1xf32, #tpu.memory_space<vmem>>, %arg5: memref<1x8x64xbf16, #tpu.memory_space<vmem>>) attributes {dimension_semantics = [#tpu.dimension_semantics<parallel>, #tpu.dimension_semantics<parallel>], iteration_bounds = array<i64: 2, 1>, scalar_prefetch = 0 : i64, scratch_operands = 0 : i64, tpu.core_type = #tpu.core_type<tc>, window_params = [{transform_indices = @transform_0, window_bounds = array<i64: 1, 16, 64>}, {pipeline_mode = #tpu.pipeline_mode<synchronous>, transform_indices = @transform_1, window_bounds = array<i64: 8, 16>}, {pipeline_mode = #tpu.pipeline_mode<synchronous>, transform_indices = @transform_2, window_bounds = array<i64: 8, 1>}, {transform_indices = @transform_3, window_bounds = array<i64: 1, 8, 64>}]} {
    %c0 = arith.constant 0 : index
    %c0_0 = arith.constant 0 : index
    %0 = vector.load %arg3[%c0, %c0_0] : memref<8x16xbf16, #tpu.memory_space<vmem>>, vector<8x16xbf16>
    %c0_1 = arith.constant 0 : index
    %c0_2 = arith.constant 0 : index
    %c0_3 = arith.constant 0 : index
    %1 = vector.load %arg2[%c0_1, %c0_2, %c0_3] : memref<1x16x64xbf16, #tpu.memory_space<vmem>>, vector<1x16x64xbf16>
    %2 = vector.shape_cast %1 : vector<1x16x64xbf16> to vector<16x64xbf16>
    %cst = arith.constant dense<0.000000e+00> : vector<8x64xf32>
    %3 = tpu.matmul %0, %2, %cst {dimension_numbers = #tpu.dot_dimension_numbers<[1], [0], [0], [1], [0, 0, 1, 1], [], []>} : vector<8x16xbf16>, vector<16x64xbf16>, vector<8x64xf32> -> vector<8x64xf32>
    %c0_4 = arith.constant 0 : index
    %c0_5 = arith.constant 0 : index
    %4 = vector.load %arg4[%c0_4, %c0_5] : memref<8x1xf32, #tpu.memory_space<vmem>>, vector<8x1xf32>
    %5 = vector.broadcast %4 : vector<8x1xf32> to vector<8x64xf32>
    %6 = arith.addf %3, %5 : vector<8x64xf32>
    %cst_6 = arith.constant 5.000000e-01 : f32
    %7 = vector.broadcast %cst_6 : f32 to vector<8x64xf32>
    %8 = arith.mulf %7, %6 : vector<8x64xf32>
    %cst_7 = arith.constant 5.000000e-01 : f32
    %9 = vector.broadcast %cst_7 : f32 to vector<8x64xf32>
    %10 = arith.mulf %9, %6 : vector<8x64xf32>
    %11 = math.tanh %10 : vector<8x64xf32>
    %cst_8 = arith.constant 1.000000e+00 : f32
    %12 = vector.broadcast %cst_8 : f32 to vector<8x64xf32>
    %13 = arith.addf %11, %12 : vector<8x64xf32>
    %14 = arith.mulf %8, %13 : vector<8x64xf32>
    %15 = arith.truncf %14 : vector<8x64xf32> to vector<8x64xbf16>
    %c0_9 = arith.constant 0 : index
    %c0_10 = arith.constant 0 : index
    %c0_11 = arith.constant 0 : index
    %16 = vector.load %arg5[%c0_9, %c0_10, %c0_11] : memref<1x8x64xbf16, #tpu.memory_space<vmem>>, vector<1x8x64xbf16>
    %17 = vector.shape_cast %16 : vector<1x8x64xbf16> to vector<8x64xbf16>
    %18 = vector.shape_cast %15 : vector<8x64xbf16> to vector<1x8x64xbf16>
    tpu.vector_store %arg5[%c0_9, %c0_10, %c0_11], %18 {strides = array<i32>} : memref<1x8x64xbf16, #tpu.memory_space<vmem>>, vector<1x8x64xbf16>,
    return
  }
  func.func @transform_0(%arg0: i32, %arg1: i32) -> (i32, i32, i32) {
    %c0_i32 = arith.constant 0 : i32
    %c0_i32_0 = arith.constant 0 : i32
    return %arg0, %c0_i32, %arg1 : i32, i32, i32
  }
  func.func @transform_1(%arg0: i32, %arg1: i32) -> (i32, i32) {
    %c0_i32 = arith.constant 0 : i32
    %c0_i32_0 = arith.constant 0 : i32
    %c0_i32_1 = arith.constant 0 : i32
    return %c0_i32, %c0_i32_0 : i32, i32
  }
  func.func @transform_2(%arg0: i32, %arg1: i32) -> (i32, i32) {
    %c0_i32 = arith.constant 0 : i32
    %c0_i32_0 = arith.constant 0 : i32
    %c0_i32_1 = arith.constant 0 : i32
    return %c0_i32, %c0_i32_0 : i32, i32
  }
  func.func @transform_3(%arg0: i32, %arg1: i32) -> (i32, i32, i32) {
    %c0_i32 = arith.constant 0 : i32
    %c0_i32_0 = arith.constant 0 : i32
    return %arg0, %c0_i32, %arg1 : i32, i32, i32
  }
}

</mosaic_0001>

<llo_original>
// kernel: focus_forward.1
$region0: #{focus_forward.1}
  #allocation0 [shape = 'u32[]', space=smem, size = 0x4, offset = 0x4, fixed_abs, tag = 'smem constant byte address 0x4 - core index']
  #allocation1 [shape = 'u32[144,128]{1,0:T(1,128)}', space=vmem, size = 0x12000, scoped, tag = 'internal scratch']
  %s0 = inlined_call_operand.vmem [shape: bf16[2,16,64], index: 0, kind: input, shape index: {}]
  %s1 = inlined_call_operand.vmem [shape: bf16[8,16], index: 1, kind: input, shape index: {}]
  %s2 = inlined_call_operand.vmem [shape: f32[8,1], index: 2, kind: input, shape index: {}]
  %s3 = inlined_call_operand.vmem [shape: bf16[2,8,64], index: 3, kind: output, shape index: {}]
  %s4 = sld [smem:[#allocation0]]
  $region45: #{focus_forward.1} parent=0
    _
  %s6 = ssub.s32 1, %s4
  %s7 = scalar_select 0, %s6, %s4
  loop: start=0, step=1, limit=4
  $region2: #{focus_forward.1} parent=0 // loop_pre_header
    _
  $region3: #{focus_forward.1} parent=0 // loop_header
    %s9 = sphi 0, %s13
    %p10 = scmp.ge.s32.totalorder %s9, 4
    %s16 = sphi 0, %s28
    %s17 = sphi 0, %s24
    %s18 = sphi 0, %s16
    %s19 = sphi 0, %s17
    %s20 = sphi 0, %s18
    %s21 = sphi 0, %s19
    %s33 = sphi 0, %s35
    %s36 = sphi 0, %s33
    %s37 = sphi 0, %s36
    %s53 = sphi 0, %s37
    %s57 = sphi 0, %s57
    %s59 = sphi 0, %s57
    %s60 = sphi 0, %s59
    %s74 = sphi 0, %s60
    %s78 = sphi 0, %s78
    %s80 = sphi 0, %s78
    %s81 = sphi 0, %s80
    %s95 = sphi 0, %s81
    %s103 = sphi 0, %s105
    %s106 = sphi 0, %s103
    %s107 = sphi 0, %s106
    %s123 = sphi 0, %s107
  $region4: #{focus_forward.1} parent=0 // loop_header_branch
    %12 = sbr.rel (%p10) target = $region8
  $region5: #{focus_forward.1} parent=0 // loop_body
    %s14 = ssub.s32 %s9, 1
    %s15 = ssub.s32 %s9, 2
    %s22 = sadd.s32 1, %s17
    %p23 = scmp.ge.s32.totalorder %s22, 1
    %s24 = scalar_select %p23, 0, %s22
    %s25 = sadd.s32 1, %s16
    %s26 = scalar_select %p23, %s25, %s16
    %p27 = scmp.ge.s32.totalorder %s26, 2
    %s28 = scalar_select %p27, 0, %s26
    %s29 = ssub.s32 %s16, %s28
    %s30 = ssub.s32 %s17, %s24
    %s31 = sor.u32 %s29, %s30
    %p32 = scmp.eq.s32.totalorder %s31, 0
    %s34 = sadd.s32 %s33, 1
    %s35 = scalar_select %p32, %s33, %s34
    %p38 = pneg %p32
    %p39 = scmp.eq.s32.totalorder %s9, 1
    %p40 = por %p38, %p39
    %p41 = scmp.ne.s32.totalorder %s33, %s36
    %p42 = scmp.eq.s32.totalorder %s9, 0
    %p43 = por %p41, %p42
    %p44 = scmp.ne.s32.totalorder %s33, %s36
    %p45 = scmp.eq.s32.totalorder %s14, 1
    %p46 = por %p44, %p45
    %p47 = scmp.ne.s32.totalorder %s36, %s37
    %p48 = scmp.eq.s32.totalorder %s14, 0
    %p49 = por %p47, %p48
    %p50 = scmp.ne.s32.totalorder %s36, %s37
    %p51 = scmp.eq.s32.totalorder %s15, 1
    %p52 = por %p50, %p51
    %p54 = scmp.ne.s32.totalorder %s37, %s53
    %p55 = scmp.eq.s32.totalorder %s15, 0
    %p56 = por %p54, %p55
    %s58 = sadd.s32 %s57, 1
    %p61 = scmp.eq.s32.totalorder %s9, 1
    %p62 = scmp.ne.s32.totalorder %s57, %s59
    %p63 = scmp.eq.s32.totalorder %s9, 0
    %p64 = por %p62, %p63
    %p65 = scmp.ne.s32.totalorder %s57, %s59
    %p66 = scmp.eq.s32.totalorder %s14, 1
    %p67 = por %p65, %p66
    %p68 = scmp.ne.s32.totalorder %s59, %s60
    %p69 = scmp.eq.s32.totalorder %s14, 0
    %p70 = por %p68, %p69
    %p71 = scmp.ne.s32.totalorder %s59, %s60
    %p72 = scmp.eq.s32.totalorder %s15, 1
    %p73 = por %p71, %p72
    %p75 = scmp.ne.s32.totalorder %s60, %s74
    %p76 = scmp.eq.s32.totalorder %s15, 0
    %p77 = por %p75, %p76
    %s79 = sadd.s32 %s78, 1
    %p82 = scmp.eq.s32.totalorder %s9, 1
    %p83 = scmp.ne.s32.totalorder %s78, %s80
    %p84 = scmp.eq.s32.totalorder %s9, 0
    %p85 = por %p83, %p84
    %p86 = scmp.ne.s32.totalorder %s78, %s80
    %p87 = scmp.eq.s32.totalorder %s14, 1
    %p88 = por %p86, %p87
    %p89 = scmp.ne.s32.totalorder %s80, %s81
    %p90 = scmp.eq.s32.totalorder %s14, 0
    %p91 = por %p89, %p90
    %p92 = scmp.ne.s32.totalorder %s80, %s81
    %p93 = scmp.eq.s32.totalorder %s15, 1
    %p94 = por %p92, %p93
    %p96 = scmp.ne.s32.totalorder %s81, %s95
    %p97 = scmp.eq.s32.totalorder %s15, 0
    %p98 = por %p96, %p97
    %s99 = ssub.s32 %s16, %s28
    %s100 = ssub.s32 %s17, %s24
    %s101 = sor.u32 %s99, %s100
    %p102 = scmp.eq.s32.totalorder %s101, 0
    %s104 = sadd.s32 %s103, 1
    %s105 = scalar_select %p102, %s103, %s104
    %p108 = pneg %p102
    %p109 = scmp.eq.s32.totalorder %s9, 1
    %p110 = por %p108, %p109
    %p111 = scmp.ne.s32.totalorder %s103, %s106
    %p112 = scmp.eq.s32.totalorder %s9, 0
    %p113 = por %p111, %p112
    %p114 = scmp.ne.s32.totalorder %s103, %s106
    %p115 = scmp.eq.s32.totalorder %s14, 1
    %p116 = por %p114, %p115
    %p117 = scmp.ne.s32.totalorder %s106, %s107
    %p118 = scmp.eq.s32.totalorder %s14, 0
    %p119 = por %p117, %p118
    %p120 = scmp.ne.s32.totalorder %s106, %s107
    %p121 = scmp.eq.s32.totalorder %s15, 1
    %p122 = por %p120, %p121
    %p124 = scmp.ne.s32.totalorder %s107, %s123
    %p125 = scmp.eq.s32.totalorder %s15, 0
    %p126 = por %p124, %p125
    %p127 = scmp.le.s32.totalorder 1, %s9
    %p128 = scmp.lt.s32.totalorder %s9, 3
    %p129 = pnand %p127, %p128
    %p130 = pneg %p129
    // Predicated region
    $region9: #{focus_forward.1} parent=5 // pred_check
      _
    $region10: #{focus_forward.1} parent=5 // pred_check_branch
      %132 = sbr.rel (%p129) target = $region12
    $region11: #{focus_forward.1} parent=5 // pred_region
      %s133 = ssub.s32 %s9, 1
      // Predicated region
      $region13: #{focus_forward.1} parent=11 // pred_check
        %p134 = pneg %p70
      $region14: #{focus_forward.1} parent=11 // pred_check_branch
        %136 = sbr.rel (%p134) target = $region16
      $region15: #{focus_forward.1} parent=11 // pred_region
        _
      $region16: #{focus_forward.1} parent=11 // pred_fallthru
        _
      // Predicated region
      $region17: #{focus_forward.1} parent=11 // pred_check
        %p137 = pneg %p91
      $region18: #{focus_forward.1} parent=11 // pred_check_branch
        %139 = sbr.rel (%p137) target = $region20
      $region19: #{focus_forward.1} parent=11 // pred_region
        _
      $region20: #{focus_forward.1} parent=11 // pred_fallthru
        _
    $region12: #{focus_forward.1} parent=5 // pred_fallthru
      _
    %p140 = scmp.lt.s32.totalorder %s9, 2
    // Predicated region
    $region21: #{focus_forward.1} parent=5 // pred_check
      %p141 = pneg %p140
    $region22: #{focus_forward.1} parent=5 // pred_check_branch
      %143 = sbr.rel (%p141) target = $region24
    $region23: #{focus_forward.1} parent=5 // pred_region
      // Predicated region
      $region25: #{focus_forward.1} parent=23 // pred_check
        %p144 = pneg %p43
      $region26: #{focus_forward.1} parent=23 // pred_check_branch
        %146 = sbr.rel (%p144) target = $region28
      $region27: #{focus_forward.1} parent=23 // pred_region
        %p147 = scmp.lt.s32.totalorder %s16, 1
        %s148 = scalar_select %p147, %s16, 1
        %p149 = scmp.lt.s32.totalorder %s17, 0
        %s150 = scalar_select %p149, %s17, 0
        %s151 = smul.addr %s148, 2
        %s152 = sadd.s32 %s150, %s151
        %s153 = smul.addr %s152, 4
        %s154 = scalar_lea.vmem %s0, %s153
      $region28: #{focus_forward.1} parent=23 // pred_fallthru
        _
    $region24: #{focus_forward.1} parent=5 // pred_fallthru
      _
    %p155 = scmp.le.s32.totalorder 1, %s9
    %p156 = scmp.lt.s32.totalorder %s9, 3
    %p157 = pnand %p155, %p156
    %p158 = pneg %p157
    // Predicated region
    $region29: #{focus_forward.1} parent=5 // pred_check
      _
    $region30: #{focus_forward.1} parent=5 // pred_check_branch
      %160 = sbr.rel (%p157) target = $region32
    $region31: #{focus_forward.1} parent=5 // pred_region
      %s161 = ssub.s32 %s9, 1
      %p162 = scmp.lt.s32.totalorder %s18, 1
      %s163 = scalar_select %p162, %s18, 1
      %p164 = scmp.lt.s32.totalorder %s19, 0
      %s165 = scalar_select %p164, %s19, 0
      %s166 = smul.addr %s163, 2
      %s167 = sadd.s32 %s165, %s166
      %s168 = smul.addr %s167, 4
      %s169 = scalar_lea.vmem %s0, %s168
      %p170 = pneg %p49
      %p171 = pneg %p46
      %p172 = pneg %p70
      %p173 = pneg %p67
      %p174 = pneg %p91
      %p175 = pneg %p88
      %p176 = pneg %p119
      %p177 = pneg %p116
      %p178 = scmp.lt.s32.totalorder %s18, 1
      %s179 = scalar_select %p178, %s18, 1
      %p180 = scmp.lt.s32.totalorder %s19, 0
      %s181 = scalar_select %p180, %s19, 0
      %s182 = sadd.s32 %s181, %s179
      %s183 = smul.addr %s182, 4
      %s184 = scalar_lea.vmem %s3, %s183
      %p185 = scmp.lt.s32.totalorder %s18, 1
      %s186 = scalar_select %p185, %s18, 1
      %p187 = scmp.lt.s32.totalorder %s19, 0
      %s188 = scalar_select %p187, %s19, 0
      %s189 = smul.addr %s186, 2
      %s190 = sadd.s32 %s188, %s189
      %s191 = smul.addr %s190, 4
      %s192 = scalar_lea.vmem %s0, %s191
      %p193 = scmp.lt.s32.totalorder %s18, 1
      %s194 = scalar_select %p193, %s18, 1
      %p195 = scmp.lt.s32.totalorder %s19, 0
      %s196 = scalar_select %p195, %s19, 0
      %s197 = sadd.s32 %s196, %s194
      %s198 = smul.addr %s197, 4
      %s199 = scalar_lea.vmem %s3, %s198
      %v201 = vld [vmem:[%s1] sm:$0xf]
      %v202 = vld [vmem:[%s192] sm:$0xf]
      %v203 = vld [vmem:[%s192 + $0x4] sm:$0xf]
      %v204 = vld [vmem:[%s2] sm:$0xff]
      %206 = vset.pattern.permute.xlu0 0
      %207 = vperm.xlu0 %206, %v204
      %v208 = vpop.permute.xlu0 %207
      %v212 = vunpack.c.l.b16 %v202
      %v213 = vunpack.c.l.b16 %v203
      %v214 = vpack.c.b16 %v213, %v212
      %vm216 = vcmask 130048
      %v218 = vsel %vm216, %v201, 0
      %220 = vmatprep.subr.bf16.mxu0 0
      %221 = vmatpush1.bf16.msra.mxu0 0
      %222 = vmatprep.subr.bf16.mxu0 0
      %223 = vmatpush1.bf16.msra.mxu0 0
      %224 = vmatprep.subr.bf16.mxu0 0
      %225 = vmatpush1.bf16.msra.mxu0 0
      %226 = vmatprep.subr.bf16.mxu0 0
      %227 = vmatpush1.bf16.msra.mxu0 0
      %228 = vmatprep.subr.bf16.mxu0 0
      %229 = vmatpush1.bf16.msra.mxu0 0
      %230 = vmatprep.subr.bf16.mxu0 0
      %231 = vmatpush1.bf16.msra.mxu0 0
      %232 = vmatprep.subr.bf16.mxu0 0
      %233 = vmatpush1.bf16.msra.mxu0 0
      %234 = vmatprep.subr.bf16.mxu0 0
      %235 = vmatpush1.bf16.msra.mxu0 %v214
      %236 = vmatprep.subr.bf16.mxu0 0
      %237 = vmatpush2.bf16.msra.mxu0 0
      %238 = vmatprep.subr.bf16.mxu0 0
      %239 = vmatpush2.bf16.msra.mxu0 0
      %240 = vmatprep.subr.bf16.mxu0 0
      %241 = vmatpush2.bf16.msra.mxu0 0
      %242 = vmatprep.subr.bf16.mxu0 0
      %243 = vmatpush2.bf16.msra.mxu0 0
      %244 = vmatprep.subr.bf16.mxu0 0
      %245 = vmatpush2.bf16.msra.mxu0 0
      %246 = vmatprep.subr.bf16.mxu0 0
      %247 = vmatpush2.bf16.msra.mxu0 0
      %248 = vmatprep.subr.bf16.mxu0 0
      %249 = vmatpush2.bf16.msra.mxu0 0
      %250 = vmatprep.subr.bf16.mxu0 0
      %251 = vmatpush2.bf16.msra.mxu0 0
      %252 = vmatprep.mubr.bf16.mxu0 0
      %253 = vmatmul.mubr.bf16.gmra.mxu0 %v218
      %v254 = vpop.f32.mrf.mxu0
      %v255 = vadd.f32 %v208, %v254
      %v256 = vpop.f32.mrf.mxu0
      %v257 = vpop.f32.mrf.mxu0
      %v258 = vpop.f32.mrf.mxu0
      %259 = vdwg.mxu0
      %v260 = vmul.f32 %v255, 0.5
      %v261 = vtanh.pop %v260
      %v262 = vadd.f32 %v261, 1.0
      %v263 = vmul.f32 %v260, %v262
      %v264 = vpack.c.bf16 %v263, %v263
      %vm265 = vcmask 519168
      %266 = vst.msk [vmem:[%s199] sm:$0xf] %vm265, %v264
      %p267 = scmp.lt.s32.totalorder %s18, 1
      %s268 = scalar_select %p267, %s18, 1
      %p269 = scmp.lt.s32.totalorder %s19, 0
      %s270 = scalar_select %p269, %s19, 0
      %s271 = sadd.s32 %s270, %s268
      %s272 = smul.addr %s271, 4
      %s273 = scalar_lea.vmem %s3, %s272
      // Predicated region
      $region33: #{focus_forward.1} parent=31 // pred_check
        %p274 = pneg %p116
      $region34: #{focus_forward.1} parent=31 // pred_check_branch
        %276 = sbr.rel (%p274) target = $region36
      $region35: #{focus_forward.1} parent=31 // pred_region
        _
      $region36: #{focus_forward.1} parent=31 // pred_fallthru
        _
    $region32: #{focus_forward.1} parent=5 // pred_fallthru
      _
    %p277 = scmp.le.s32.totalorder 2, %s9
    // Predicated region
    $region37: #{focus_forward.1} parent=5 // pred_check
      %p278 = pneg %p277
    $region38: #{focus_forward.1} parent=5 // pred_check_branch
      %280 = sbr.rel (%p278) target = $region40
    $region39: #{focus_forward.1} parent=5 // pred_region
      %s281 = ssub.s32 %s9, 2
      // Predicated region
      $region41: #{focus_forward.1} parent=39 // pred_check
        %p282 = pneg %p122
      $region42: #{focus_forward.1} parent=39 // pred_check_branch
        %284 = sbr.rel (%p282) target = $region44
      $region43: #{focus_forward.1} parent=39 // pred_region
        %p285 = scmp.lt.s32.totalorder %s20, 1
        %s286 = scalar_select %p285, %s20, 1
        %p287 = scmp.lt.s32.totalorder %s21, 0
        %s288 = scalar_select %p287, %s21, 0
        %s289 = sadd.s32 %s288, %s286
        %s290 = smul.addr %s289, 4
        %s291 = scalar_lea.vmem %s3, %s290
      $region44: #{focus_forward.1} parent=39 // pred_fallthru
        _
    $region40: #{focus_forward.1} parent=5 // pred_fallthru
      _
  $region6: #{focus_forward.1} parent=0 // loop_footer
    %s13 = sadd.s32 1, %s9
  $region7: #{focus_forward.1} parent=0 // loop_footer_branch
    %8 = sbr.rel target = $region3
  $region8: #{focus_forward.1} parent=0 // loop_exit
    _

</llo_original>
